<compile_context>
chip_gen: v5e
topology: v5e:2x2
jax: 0.10.0
libtpu: 0.0.40
codegen_flags: <defaults>
</compile_context>

<pallas_src>
import functools

import jax
import jax.numpy as jnp
from jax import lax
from jax.experimental import pallas as pl
from jax.experimental.pallas import tpu as pltpu

_LANE = 128
_SUBLANE = 8


def _round_up(n, m):
    return ((n + m - 1) // m) * m


def _vmem_capacity_bytes():
    """Physical VMEM of the current part; conservative fallback if unknown."""
    try:
        return int(pltpu.get_tpu_info().vmem_capacity_bytes)
    except Exception:
        return 64 << 20  # assume a v7x-sized (64 MiB) part


def _pick_spatial_tile(hw, cap):
    """Grid spatial block: must be a multiple of 128 or the full extent."""
    if hw <= cap:
        return hw
    c = (min(cap, hw) // _LANE) * _LANE
    while c >= _LANE:
        if hw % c == 0:
            return c
        c -= _LANE
    return hw  # no legal smaller tile; full extent (budget-checked by caller)


def _pick_chunk(tile_hw, cap):
    """In-kernel ds() chunk width: any divisor is legal; prefer lane multiples."""
    cap = max(1, min(cap, tile_hw))
    if tile_hw <= cap:
        return tile_hw
    c = (cap // _LANE) * _LANE
    while c >= _LANE:
        if tile_hw % c == 0:
            return c
        c -= _LANE
    for c in range(cap, 0, -1):
        if tile_hw % c == 0:
            return c
    return tile_hw


def _feature_extractor_kernel(x_ref, w1t_ref, w2_ref, b2_ref, out_ref,
                              acc_ref, *, chunk_hw, n_chunks):
    """One (image, spatial-tile) grid step.

    x_ref  : (Cpad, tile_hw) bf16 -- image pixels; "ones" bias channel folded in
    w1t_ref: (Fp, Cpad)      bf16 -- frozen backbone-proxy weight^T (+ b1 col)
    w2_ref : (Fp, Cp)        bf16 -- linear-probe weight, pre-scaled by 1/HW
    b2_ref : (1, Cp)         f32  -- linear-probe bias
    out_ref: (1, Cp)         f32  -- logits for this image
    acc_ref: (Fp, chunk_hw)  f32  -- per-image running spatial partial sums
                                     (columns reduced once at finalize)
    """
    s = pl.program_id(1)

    @pl.when(s == 0)
    def _init():
        acc_ref[...] = jnp.zeros_like(acc_ref)

    # Hoisted out of the chunk loop (loop-invariant; no per-iteration reload).
    w1t = w1t_ref[...]

    def _chunk(i, carry):
        start = pl.multiple_of(i * chunk_hw, chunk_hw)
        xc = x_ref[:, pl.ds(start, chunk_hw)]                  # (Cpad, chunk)
        # Frozen-backbone proxy: channel projection + bias (folded into the
        # contraction via the ones channel), MXU bf16 x bf16 -> f32.
        pre = jnp.dot(w1t, xc, preferred_element_type=jnp.float32)  # (Fp, chunk)
        acc_ref[...] += jnp.maximum(pre, 0.0)                  # ReLU + pool acc
        return carry

    lax.fori_loop(0, n_chunks, _chunk, 0, unroll=n_chunks <= 4)

    @pl.when(s == pl.num_programs(1) - 1)
    def _finalize():
        # Sum the chunk columns (= full spatial sum) with a tiny trans_b matmul
        # so the pooled vector lands lane-dense as (1, Fp).
        ones_row = jnp.ones((1, chunk_hw), dtype=jnp.float32)
        pooled = lax.dot_general(
            ones_row, acc_ref[...],
            dimension_numbers=(((1,), (1,)), ((), ())),
            preferred_element_type=jnp.float32)                # (1, Fp)
        # Linear probe; 1/HW is already folded into w2, so pooled is the sum.
        logits = jnp.dot(pooled.astype(jnp.bfloat16), w2_ref[...],
                         preferred_element_type=jnp.float32)   # (1, Cp)
        out_ref[...] = logits + b2_ref[...]


def feature_extractor(x_nchw, w1, b1, w2, b2, *,
                      max_spatial_tile=None, max_chunk=None):
    """FeatureExtractor.forward: NCHW images -> (B, num_classes) logits.

    w1/b1 stand in for the frozen backbone (channel projection + ReLU);
    w2/b2 are the trainable linear probe (nn.Linear(feature_size, num_classes)).
    """
    B, Cin, H, W = x_nchw.shape
    HW = H * W
    F = w1.shape[1]
    C = w2.shape[1]

    Fp = _round_up(F, _LANE)             # lane-dense feature dim
    Cp = _round_up(C, _LANE)             # lane-dense class dim
    Cpad = _round_up(Cin + 1, _SUBLANE)  # +1 constant "ones" bias channel

    # ---------------- HBM-side operand prep (cheap XLA ops) ----------------
    # NCHW -> (B, Cin, HW): free reshape, no transpose pass; minor dim is HW.
    x_flat = x_nchw.reshape(B, Cin, HW).astype(jnp.bfloat16)
    parts = [x_flat, jnp.ones((B, 1, HW), jnp.bfloat16)]
    if Cpad > Cin + 1:
        parts.append(jnp.zeros((B, Cpad - Cin - 1, HW), jnp.bfloat16))
    x_aug = jnp.concatenate(parts, axis=1)                     # (B, Cpad, HW)

    # Backbone-proxy weight, pre-transposed so the in-kernel dot is the plain
    # (Fp, Cpad) @ (Cpad, chunk) form; b1 folded in as the bias column.
    w1t = jnp.zeros((Fp, Cpad), jnp.float32)
    w1t = w1t.at[:F, :Cin].set(jnp.transpose(w1).astype(jnp.float32))
    w1t = w1t.at[:F, Cin].set(b1.astype(jnp.float32))
    w1t = w1t.astype(jnp.bfloat16)

    # Linear probe: fold the adaptive-avg-pool 1/HW into w2; bf16 halves its
    # HBM read and (double-buffered) VMEM footprint. Padded rows/cols are zero.
    w2p = jnp.zeros((Fp, Cp), jnp.float32)
    w2p = w2p.at[:F, :C].set(w2.astype(jnp.float32) * (1.0 / HW))
    w2p = w2p.astype(jnp.bfloat16)
    b2p = jnp.zeros((1, Cp), jnp.float32).at[0, :C].set(b2.astype(jnp.float32))

    # -------- Tiling / VMEM budgets (v5e/v6e ~128 MiB vs v7x ~64 MiB) -------
    vmem_cap = _vmem_capacity_bytes()
    big_vmem = vmem_cap >= (100 << 20)
    x_block_budget = (4 << 20) if big_vmem else (2 << 20)
    acc_budget = (4 << 20) if big_vmem else (2 << 20)
    vmem_limit = (64 << 20) if big_vmem else (40 << 20)

    spatial_cap = max(1, x_block_budget // (Cpad * 2))
    if max_spatial_tile is not None:
        spatial_cap = min(spatial_cap, max_spatial_tile)
    tile_hw = _pick_spatial_tile(HW, spatial_cap)

    chunk_cap = max(1, acc_budget // (Fp * 4))
    if max_chunk is not None:
        chunk_cap = min(chunk_cap, max_chunk)
    chunk_hw = _pick_chunk(tile_hw, chunk_cap)
    n_chunks = tile_hw // chunk_hw

    # Rough per-step VMEM need (double-buffered blocks + persistent scratch).
    est = (2 * (Cpad * tile_hw * 2          # x block (bf16)
                + Fp * _LANE * 2            # w1t block (lane-padded bf16)
                + Fp * Cp * 2               # w2 block (bf16)
                + _SUBLANE * Cp * 4         # b2 block (sublane-padded f32)
                + _SUBLANE * Cp * 4)        # out block
           + Fp * chunk_hw * 4)             # acc scratch (f32)
    if est > vmem_limit:
        raise ValueError(
            f"FeatureExtractor tiling does not fit VMEM: need ~{est} bytes "
            f"(tile_hw={tile_hw}, chunk_hw={chunk_hw}, Fp={Fp}, Cp={Cp}) "
            f"with vmem_limit_bytes={vmem_limit}.")

    grid = (B, HW // tile_hw)

    kernel = functools.partial(_feature_extractor_kernel,
                               chunk_hw=chunk_hw, n_chunks=n_chunks)

    cost = pl.CostEstimate(
        flops=2 * B * HW * Cpad * Fp + 2 * B * Fp * Cp,
        transcendentals=0,
        bytes_accessed=(x_aug.size * 2 + w1t.size * 2 + w2p.size * 2
                        + b2p.size * 4 + B * Cp * 4),
    )

    out3 = pl.pallas_call(
        kernel,
        out_shape=jax.ShapeDtypeStruct((B, 1, Cp), jnp.float32),
        grid_spec=pltpu.PrefetchScalarGridSpec(
            num_scalar_prefetch=0,
            grid=grid,
            in_specs=[
                # Image pixels: batch dim squeezed, spatial axis tiled,
                # lanes = spatial positions (lane-dense).
                pl.BlockSpec((None, Cpad, tile_hw), lambda b, s: (b, 0, s)),
                # Loop-invariant weights (constant index map -> fetched once).
                # TODO(synk): pipeline_mode=pl.Buffered(1) would single-buffer
                # these (extra VMEM headroom on v7x); kept default for maximum
                # lowering portability.
                pl.BlockSpec((Fp, Cpad), lambda b, s: (0, 0)),
                pl.BlockSpec((Fp, Cp), lambda b, s: (0, 0)),
                pl.BlockSpec((1, Cp), lambda b, s: (0, 0)),
            ],
            out_specs=pl.BlockSpec((None, 1, Cp), lambda b, s: (b, 0, 0)),
            scratch_shapes=[pltpu.VMEM((Fp, chunk_hw), jnp.float32)],
        ),
        compiler_params=pltpu.CompilerParams(
            dimension_semantics=("parallel", "arbitrary"),
            vmem_limit_bytes=vmem_limit,
        ),
        cost_estimate=cost,
    )(x_aug, w1t, w2p, b2p)

    return out3[:, 0, :C]


def _reference(x_nchw, w1, b1, w2, b2, *, match_kernel_precision=True):
    """Pure-JAX reference mirroring the PyTorch forward."""
    B, Cin, H, W = x_nchw.shape
    HW = H * W
    x = x_nchw.reshape(B, Cin, HW).astype(jnp.float32)
    if match_kernel_precision:  # mirror the kernel's bf16 quantization
        x = x.astype(jnp.bfloat16).astype(jnp.float32)
        w1m = w1.astype(jnp.bfloat16).astype(jnp.float32)
        b1m = b1.astype(jnp.bfloat16).astype(jnp.float32)
    else:
        w1m = w1.astype(jnp.float32)
        b1m = b1.astype(jnp.float32)
    pre = jnp.einsum('bct,cf->btf', x, w1m,
                     precision=jax.lax.Precision.HIGHEST) + b1m[None, None, :]
    feats = jnp.maximum(pre, 0.0)
    if match_kernel_precision:
        pooled_sum = jnp.sum(feats, axis=1)                      # (B, F)
        w2s = (w2.astype(jnp.float32) / HW).astype(jnp.bfloat16).astype(
            jnp.float32)
        pooled_b = pooled_sum.astype(jnp.bfloat16).astype(jnp.float32)
        logits = jnp.dot(pooled_b, w2s,
                         precision=jax.lax.Precision.HIGHEST) + b2[None, :]
    else:
        pooled = jnp.mean(feats, axis=1)
        logits = jnp.dot(pooled, w2.astype(jnp.float32),
                         precision=jax.lax.Precision.HIGHEST) + b2[None, :]
    return logits


if __name__ == "__main__":
    # Small shapes consistent with the module's forward (NCHW images in,
    # logits out). feature_size / num_classes scaled down for a quick run.
    B, Cin, H, W = 2, 4, 16, 16
    FEATURE_SIZE = 32
    NUM_CLASSES = 16

    key = jax.random.PRNGKey(0)
    k_x, k_w1, k_b1, k_w2, k_b2 = jax.random.split(key, 5)

    x = jax.random.normal(k_x, (B, Cin, H, W), dtype=jnp.float32)

    # TODO(synk): synthetic frozen-backbone stand-in weights (no torchvision
    # checkpoint load).
    w1 = jax.random.normal(k_w1, (Cin, FEATURE_SIZE), dtype=jnp.float32) * 0.1
    b1 = jax.random.normal(k_b1, (FEATURE_SIZE,), dtype=jnp.float32) * 0.01
    w2 = jax.random.normal(k_w2, (FEATURE_SIZE, NUM_CLASSES),
                           dtype=jnp.float32) * 0.1
    b2 = jax.random.normal(k_b2, (NUM_CLASSES,), dtype=jnp.float32) * 0.01

    ref_matched = _reference(x, w1, b1, w2, b2, match_kernel_precision=True)
    ref_f32 = _reference(x, w1, b1, w2, b2, match_kernel_precision=False)

    # Exercise (a) the single-step fast path, (b) the multi-spatial-grid-step
    # accumulator path, and (c) the multi-chunk in-kernel reduction loop.
    configs = (
        {},                           # tile_hw = HW = 256, 1 chunk
        {"max_spatial_tile": 128},    # 2 spatial grid steps
        {"max_chunk": 128},           # 1 grid step, 2 in-kernel chunks
    )
    for cfg in configs:
        fn = jax.jit(functools.partial(feature_extractor, **cfg))
        out = jax.block_until_ready(fn(x, w1, b1, w2, b2))
        assert out.shape == (B, NUM_CLASSES), (cfg, out.shape)
        assert jnp.allclose(out, ref_matched, atol=5e-3, rtol=5e-3), \
            f"mismatch vs precision-matched reference for {cfg}"
        assert jnp.allclose(out, ref_f32, atol=5e-2, rtol=5e-2), \
            f"mismatch vs f32 reference for {cfg}"

    print("KERNEL_OK")
</pallas_src>

<mosaic_0001>
module attributes {stable_mosaic.version = 11 : i64} {
  func.func @_feature_extractor_kernel(%arg0: i32, %arg1: i32, %arg2: memref<1x8x256xbf16, #tpu.memory_space<vmem>>, %arg3: memref<128x8xbf16, #tpu.memory_space<vmem>>, %arg4: memref<128x128xbf16, #tpu.memory_space<vmem>>, %arg5: memref<1x128xf32, #tpu.memory_space<vmem>>, %arg6: memref<1x1x128xf32, #tpu.memory_space<vmem>>, %arg7: memref<128x256xf32, #tpu.memory_space<vmem>>) attributes {dimension_semantics = [#tpu.dimension_semantics<parallel>, #tpu.dimension_semantics<arbitrary>], iteration_bounds = array<i64: 2, 1>, scalar_prefetch = 0 : i64, scratch_operands = 1 : i64, tpu.core_type = #tpu.core_type<tc>, window_params = [{transform_indices = @transform_0, window_bounds = array<i64: 1, 8, 256>}, {pipeline_mode = #tpu.pipeline_mode<synchronous>, transform_indices = @transform_1, window_bounds = array<i64: 128, 8>}, {pipeline_mode = #tpu.pipeline_mode<synchronous>, transform_indices = @transform_2, window_bounds = array<i64: 128, 128>}, {pipeline_mode = #tpu.pipeline_mode<synchronous>, transform_indices = @transform_3, window_bounds = array<i64: 1, 128>}, {transform_indices = @transform_4, window_bounds = array<i64: 1, 1, 128>}]} {
    %c0_i32 = arith.constant 0 : i32
    %0 = arith.cmpi eq, %arg1, %c0_i32 : i32
    %1 = arith.extui %0 : i1 to i32
    %c0_i32_0 = arith.constant 0 : i32
    %2 = arith.cmpi ne, %1, %c0_i32_0 : i32
    scf.if %2 {
      %cst_12 = arith.constant 0.000000e+00 : f32
      %18 = vector.broadcast %cst_12 : f32 to vector<128x256xf32>
      %c0_13 = arith.constant 0 : index
      %c0_14 = arith.constant 0 : index
      %19 = vector.load %arg7[%c0_13, %c0_14] : memref<128x256xf32, #tpu.memory_space<vmem>>, vector<128x256xf32>
      tpu.vector_store %arg7[%c0_13, %c0_14], %18 {strides = array<i32>} : memref<128x256xf32, #tpu.memory_space<vmem>>, vector<128x256xf32>,
    } else {
    }
    %c0 = arith.constant 0 : index
    %c0_1 = arith.constant 0 : index
    %3 = vector.load %arg3[%c0, %c0_1] : memref<128x8xbf16, #tpu.memory_space<vmem>>, vector<128x8xbf16>
    %c0_i32_2 = arith.constant 0 : i32
    %c256_i32 = arith.constant 256 : i32
    %4 = arith.muli %c0_i32_2, %c256_i32 : i32
    %5 = tpu.assume_multiple %4, 256 : i32
    %c0_3 = arith.constant 0 : index
    %c0_4 = arith.constant 0 : index
    %6 = arith.index_cast %5 : i32 to index
    %7 = vector.load %arg2[%c0_3, %c0_4, %6] : memref<1x8x256xbf16, #tpu.memory_space<vmem>>, vector<1x8x256xbf16>
    %8 = vector.shape_cast %7 : vector<1x8x256xbf16> to vector<8x256xbf16>
    %cst = arith.constant dense<0.000000e+00> : vector<128x256xf32>
    %9 = tpu.matmul %3, %8, %cst {dimension_numbers = #tpu.dot_dimension_numbers<[1], [0], [0], [1], [0, 0, 1, 1], [], []>} : vector<128x8xbf16>, vector<8x256xbf16>, vector<128x256xf32> -> vector<128x256xf32>
    %c0_5 = arith.constant 0 : index
    %c0_6 = arith.constant 0 : index
    %10 = vector.load %arg7[%c0_5, %c0_6] : memref<128x256xf32, #tpu.memory_space<vmem>>, vector<128x256xf32>
    %cst_7 = arith.constant 0.000000e+00 : f32
    %11 = vector.broadcast %cst_7 : f32 to vector<128x256xf32>
    %12 = arith.maximumf %9, %11 : vector<128x256xf32>
    %13 = arith.addf %10, %12 : vector<128x256xf32>
    %c0_8 = arith.constant 0 : index
    %c0_9 = arith.constant 0 : index
    %14 = vector.load %arg7[%c0_8, %c0_9] : memref<128x256xf32, #tpu.memory_space<vmem>>, vector<128x256xf32>
    tpu.vector_store %arg7[%c0_8, %c0_9], %13 {strides = array<i32>} : memref<128x256xf32, #tpu.memory_space<vmem>>, vector<128x256xf32>,
    %c1_i32 = arith.constant 1 : i32
    %c0_i32_10 = arith.constant 0 : i32
    %15 = arith.cmpi eq, %arg1, %c0_i32_10 : i32
    %16 = arith.extui %15 : i1 to i32
    %c0_i32_11 = arith.constant 0 : i32
    %17 = arith.cmpi ne, %16, %c0_i32_11 : i32
    scf.if %17 {
      %cst_12 = arith.constant 1.000000e+00 : f32
      %18 = vector.broadcast %cst_12 : f32 to vector<1x256xf32>
      %c0_13 = arith.constant 0 : index
      %c0_14 = arith.constant 0 : index
      %19 = vector.load %arg7[%c0_13, %c0_14] : memref<128x256xf32, #tpu.memory_space<vmem>>, vector<128x256xf32>
      %cst_15 = arith.constant dense<0.000000e+00> : vector<1x128xf32>
      %20 = tpu.matmul %18, %19, %cst_15 {dimension_numbers = #tpu.dot_dimension_numbers<[1], [1], [0], [0], [0, 0, 1, 0], [], []>} : vector<1x256xf32>, vector<128x256xf32>, vector<1x128xf32> -> vector<1x128xf32>
      %21 = arith.truncf %20 : vector<1x128xf32> to vector<1x128xbf16>
      %c0_16 = arith.constant 0 : index
      %c0_17 = arith.constant 0 : index
      %22 = vector.load %arg4[%c0_16, %c0_17] : memref<128x128xbf16, #tpu.memory_space<vmem>>, vector<128x128xbf16>
      %cst_18 = arith.constant dense<0.000000e+00> : vector<1x128xf32>
      %23 = tpu.matmul %21, %22, %cst_18 {dimension_numbers = #tpu.dot_dimension_numbers<[1], [0], [0], [1], [0, 0, 1, 1], [], []>} : vector<1x128xbf16>, vector<128x128xbf16>, vector<1x128xf32> -> vector<1x128xf32>
      %c0_19 = arith.constant 0 : index
      %c0_20 = arith.constant 0 : index
      %24 = vector.load %arg5[%c0_19, %c0_20] : memref<1x128xf32, #tpu.memory_space<vmem>>, vector<1x128xf32>
      %25 = arith.addf %23, %24 : vector<1x128xf32>
      %c0_21 = arith.constant 0 : index
      %c0_22 = arith.constant 0 : index
      %c0_23 = arith.constant 0 : index
      %26 = vector.load %arg6[%c0_21, %c0_22, %c0_23] : memref<1x1x128xf32, #tpu.memory_space<vmem>>, vector<1x1x128xf32>
      %27 = vector.shape_cast %26 : vector<1x1x128xf32> to vector<1x128xf32>
      %28 = vector.shape_cast %25 : vector<1x128xf32> to vector<1x1x128xf32>
      tpu.vector_store %arg6[%c0_21, %c0_22, %c0_23], %28 {strides = array<i32>} : memref<1x1x128xf32, #tpu.memory_space<vmem>>, vector<1x1x128xf32>,
    } else {
    }
    return
  }
  func.func @transform_0(%arg0: i32, %arg1: i32) -> (i32, i32, i32) {
    %c0_i32 = arith.constant 0 : i32
    %c0_i32_0 = arith.constant 0 : i32
    return %arg0, %c0_i32, %arg1 : i32, i32, i32
  }
  func.func @transform_1(%arg0: i32, %arg1: i32) -> (i32, i32) {
    %c0_i32 = arith.constant 0 : i32
    %c0_i32_0 = arith.constant 0 : i32
    %c0_i32_1 = arith.constant 0 : i32
    return %c0_i32, %c0_i32_0 : i32, i32
  }
  func.func @transform_2(%arg0: i32, %arg1: i32) -> (i32, i32) {
    %c0_i32 = arith.constant 0 : i32
    %c0_i32_0 = arith.constant 0 : i32
    %c0_i32_1 = arith.constant 0 : i32
    return %c0_i32, %c0_i32_0 : i32, i32
  }
  func.func @transform_3(%arg0: i32, %arg1: i32) -> (i32, i32) {
    %c0_i32 = arith.constant 0 : i32
    %c0_i32_0 = arith.constant 0 : i32
    %c0_i32_1 = arith.constant 0 : i32
    return %c0_i32, %c0_i32_0 : i32, i32
  }
  func.func @transform_4(%arg0: i32, %arg1: i32) -> (i32, i32, i32) {
    %c0_i32 = arith.constant 0 : i32
    %c0_i32_0 = arith.constant 0 : i32
    %c0_i32_1 = arith.constant 0 : i32
    return %arg0, %c0_i32, %c0_i32_0 : i32, i32, i32
  }
}

</mosaic_0001>

<llo_original>
// kernel: feature_extractor.1
$region0: #{feature_extractor.1}
  #allocation0 [shape = 'u32[]', space=smem, size = 0x4, offset = 0x4, fixed_abs, tag = 'smem constant byte address 0x4 - core index']
  #allocation1 [shape = 'u32[72,128]{1,0:T(1,128)}', space=vmem, size = 0x9000, scoped, tag = 'internal scratch']
  #allocation2 [shape = 'f32[128,256]{1,0:T(8,128)}', space=vmem, size = 0x20000, scoped, tag = 'scratch operand']
  %s0 = inlined_call_operand.vmem [shape: bf16[2,8,256], index: 0, kind: input, shape index: {}]
  %s1 = inlined_call_operand.vmem [shape: bf16[128,8], index: 1, kind: input, shape index: {}]
  %s2 = inlined_call_operand.vmem [shape: bf16[128,128], index: 2, kind: input, shape index: {}]
  %s3 = inlined_call_operand.vmem [shape: f32[1,128], index: 3, kind: input, shape index: {}]
  %s4 = inlined_call_operand.hbm [shape: f32[2,1,128], index: 4, kind: output, shape index: {}]
  %s5 = sld [smem:[#allocation0]]
  $region57: #{feature_extractor.1} parent=0
    _
  %s7 = ssub.s32 1, %s5
  %s8 = scalar_select 0, %s7, %s5
  $region1: #{feature_extractor.1} parent=0
    #allocation3 [shape = 'u8[1024]{0}', space=vmem, size = 0x400, scoped, tag = 'output window, operand 0']
    #allocation4 [shape = 's32[2]{0}', space=sflag, size = 0x8, scoped, tag = 'scoped memory for feature_extractor.1']
    %9 = vsyncpa [#allocation4], 0
    %s10 = scalar_lea.sflag [#allocation4], 1
    %11 = vsyncpa %s10, 0
    loop: start=0, step=1, limit=4
    $region2: #{feature_extractor.1} parent=1 // loop_pre_header
      _
    $region3: #{feature_extractor.1} parent=1 // loop_header
      %s13 = sphi 0, %s17
      %p14 = scmp.ge.s32.totalorder %s13, 4
      %s20 = sphi 0, %s32
      %s21 = sphi 0, %s28
      %s22 = sphi 0, %s20
      %s23 = sphi 0, %s21
      %s24 = sphi 0, %s22
      %s25 = sphi 0, %s23
      %s37 = sphi 0, %s39
      %s40 = sphi 0, %s37
      %s41 = sphi 0, %s40
      %s57 = sphi 0, %s41
      %s61 = sphi 0, %s61
      %s63 = sphi 0, %s61
      %s64 = sphi 0, %s63
      %s78 = sphi 0, %s64
      %s82 = sphi 0, %s82
      %s84 = sphi 0, %s82
      %s85 = sphi 0, %s84
      %s99 = sphi 0, %s85
      %s103 = sphi 0, %s103
      %s105 = sphi 0, %s103
      %s106 = sphi 0, %s105
      %s120 = sphi 0, %s106
      %s126 = sphi 0, %s128
      %s129 = sphi 0, %s126
      %s130 = sphi 0, %s129
      %s146 = sphi 0, %s130
    $region4: #{feature_extractor.1} parent=1 // loop_header_branch
      %16 = sbr.rel (%p14) target = $region8
    $region5: #{feature_extractor.1} parent=1 // loop_body
      %s18 = ssub.s32 %s13, 1
      %s19 = ssub.s32 %s13, 2
      %s26 = sadd.s32 1, %s21
      %p27 = scmp.ge.s32.totalorder %s26, 1
      %s28 = scalar_select %p27, 0, %s26
      %s29 = sadd.s32 1, %s20
      %s30 = scalar_select %p27, %s29, %s20
      %p31 = scmp.ge.s32.totalorder %s30, 2
      %s32 = scalar_select %p31, 0, %s30
      %s33 = ssub.s32 %s20, %s32
      %s34 = ssub.s32 %s21, %s28
      %s35 = sor.u32 %s33, %s34
      %p36 = scmp.eq.s32.totalorder %s35, 0
      %s38 = sadd.s32 %s37, 1
      %s39 = scalar_select %p36, %s37, %s38
      %p42 = pneg %p36
      %p43 = scmp.eq.s32.totalorder %s13, 1
      %p44 = por %p42, %p43
      %p45 = scmp.ne.s32.totalorder %s37, %s40
      %p46 = scmp.eq.s32.totalorder %s13, 0
      %p47 = por %p45, %p46
      %p48 = scmp.ne.s32.totalorder %s37, %s40
      %p49 = scmp.eq.s32.totalorder %s18, 1
      %p50 = por %p48, %p49
      %p51 = scmp.ne.s32.totalorder %s40, %s41
      %p52 = scmp.eq.s32.totalorder %s18, 0
      %p53 = por %p51, %p52
      %p54 = scmp.ne.s32.totalorder %s40, %s41
      %p55 = scmp.eq.s32.totalorder %s19, 1
      %p56 = por %p54, %p55
      %p58 = scmp.ne.s32.totalorder %s41, %s57
      %p59 = scmp.eq.s32.totalorder %s19, 0
      %p60 = por %p58, %p59
      %s62 = sadd.s32 %s61, 1
      %p65 = scmp.eq.s32.totalorder %s13, 1
      %p66 = scmp.ne.s32.totalorder %s61, %s63
      %p67 = scmp.eq.s32.totalorder %s13, 0
      %p68 = por %p66, %p67
      %p69 = scmp.ne.s32.totalorder %s61, %s63
      %p70 = scmp.eq.s32.totalorder %s18, 1
      %p71 = por %p69, %p70
      %p72 = scmp.ne.s32.totalorder %s63, %s64
      %p73 = scmp.eq.s32.totalorder %s18, 0
      %p74 = por %p72, %p73
      %p75 = scmp.ne.s32.totalorder %s63, %s64
      %p76 = scmp.eq.s32.totalorder %s19, 1
      %p77 = por %p75, %p76
      %p79 = scmp.ne.s32.totalorder %s64, %s78
      %p80 = scmp.eq.s32.totalorder %s19, 0
      %p81 = por %p79, %p80
      %s83 = sadd.s32 %s82, 1
      %p86 = scmp.eq.s32.totalorder %s13, 1
      %p87 = scmp.ne.s32.totalorder %s82, %s84
      %p88 = scmp.eq.s32.totalorder %s13, 0
      %p89 = por %p87, %p88
      %p90 = scmp.ne.s32.totalorder %s82, %s84
      %p91 = scmp.eq.s32.totalorder %s18, 1
      %p92 = por %p90, %p91
      %p93 = scmp.ne.s32.totalorder %s84, %s85
      %p94 = scmp.eq.s32.totalorder %s18, 0
      %p95 = por %p93, %p94
      %p96 = scmp.ne.s32.totalorder %s84, %s85
      %p97 = scmp.eq.s32.totalorder %s19, 1
      %p98 = por %p96, %p97
      %p100 = scmp.ne.s32.totalorder %s85, %s99
      %p101 = scmp.eq.s32.totalorder %s19, 0
      %p102 = por %p100, %p101
      %s104 = sadd.s32 %s103, 1
      %p107 = scmp.eq.s32.totalorder %s13, 1
      %p108 = scmp.ne.s32.totalorder %s103, %s105
      %p109 = scmp.eq.s32.totalorder %s13, 0
      %p110 = por %p108, %p109
      %p111 = scmp.ne.s32.totalorder %s103, %s105
      %p112 = scmp.eq.s32.totalorder %s18, 1
      %p113 = por %p111, %p112
      %p114 = scmp.ne.s32.totalorder %s105, %s106
      %p115 = scmp.eq.s32.totalorder %s18, 0
      %p116 = por %p114, %p115
      %p117 = scmp.ne.s32.totalorder %s105, %s106
      %p118 = scmp.eq.s32.totalorder %s19, 1
      %p119 = por %p117, %p118
      %p121 = scmp.ne.s32.totalorder %s106, %s120
      %p122 = scmp.eq.s32.totalorder %s19, 0
      %p123 = por %p121, %p122
      %s124 = ssub.s32 %s20, %s32
      %p125 = scmp.eq.s32.totalorder %s124, 0
      %s127 = sadd.s32 %s126, 1
      %s128 = scalar_select %p125, %s126, %s127
      %p131 = pneg %p125
      %p132 = scmp.eq.s32.totalorder %s13, 1
      %p133 = por %p131, %p132
      %p134 = scmp.ne.s32.totalorder %s126, %s129
      %p135 = scmp.eq.s32.totalorder %s13, 0
      %p136 = por %p134, %p135
      %p137 = scmp.ne.s32.totalorder %s126, %s129
      %p138 = scmp.eq.s32.totalorder %s18, 1
      %p139 = por %p137, %p138
      %p140 = scmp.ne.s32.totalorder %s129, %s130
      %p141 = scmp.eq.s32.totalorder %s18, 0
      %p142 = por %p140, %p141
      %p143 = scmp.ne.s32.totalorder %s129, %s130
      %p144 = scmp.eq.s32.totalorder %s19, 1
      %p145 = por %p143, %p144
      %p147 = scmp.ne.s32.totalorder %s130, %s146
      %p148 = scmp.eq.s32.totalorder %s19, 0
      %p149 = por %p147, %p148
      %p150 = scmp.le.s32.totalorder 1, %s13
      %p151 = scmp.lt.s32.totalorder %s13, 3
      %p152 = pnand %p150, %p151
      %p153 = pneg %p152
      // Predicated region
      $region9: #{feature_extractor.1} parent=5 // pred_check
        _
      $region10: #{feature_extractor.1} parent=5 // pred_check_branch
        %155 = sbr.rel (%p152) target = $region12
      $region11: #{feature_extractor.1} parent=5 // pred_region
        %s156 = ssub.s32 %s13, 1
        // Predicated region
        $region13: #{feature_extractor.1} parent=11 // pred_check
          %p157 = pneg %p74
        $region14: #{feature_extractor.1} parent=11 // pred_check_branch
          %159 = sbr.rel (%p157) target = $region16
        $region15: #{feature_extractor.1} parent=11 // pred_region
          _
        $region16: #{feature_extractor.1} parent=11 // pred_fallthru
          _
        // Predicated region
        $region17: #{feature_extractor.1} parent=11 // pred_check
          %p160 = pneg %p95
        $region18: #{feature_extractor.1} parent=11 // pred_check_branch
          %162 = sbr.rel (%p160) target = $region20
        $region19: #{feature_extractor.1} parent=11 // pred_region
          _
        $region20: #{feature_extractor.1} parent=11 // pred_fallthru
          _
        // Predicated region
        $region21: #{feature_extractor.1} parent=11 // pred_check
          %p163 = pneg %p116
        $region22: #{feature_extractor.1} parent=11 // pred_check_branch
          %165 = sbr.rel (%p163) target = $region24
        $region23: #{feature_extractor.1} parent=11 // pred_region
          _
        $region24: #{feature_extractor.1} parent=11 // pred_fallthru
          _
      $region12: #{feature_extractor.1} parent=5 // pred_fallthru
        _
      %p166 = scmp.lt.s32.totalorder %s13, 2
      // Predicated region
      $region25: #{feature_extractor.1} parent=5 // pred_check
        %p167 = pneg %p166
      $region26: #{feature_extractor.1} parent=5 // pred_check_branch
        %169 = sbr.rel (%p167) target = $region28
      $region27: #{feature_extractor.1} parent=5 // pred_region
        // Predicated region
        $region29: #{feature_extractor.1} parent=27 // pred_check
          %p170 = pneg %p47
        $region30: #{feature_extractor.1} parent=27 // pred_check_branch
          %172 = sbr.rel (%p170) target = $region32
        $region31: #{feature_extractor.1} parent=27 // pred_region
          %s173 = smul.u32 2, %s21
          %p174 = scmp.lt.s32.totalorder %s20, 1
          %s175 = scalar_select %p174, %s20, 1
          %p176 = scmp.lt.s32.totalorder %s173, 1
          %s177 = scalar_select %p176, %s173, 1
          %s178 = smul.addr %s175, 2
          %s179 = sadd.s32 %s177, %s178
          %s180 = smul.addr %s179, 4
          %s181 = scalar_lea.vmem %s0, %s180
          %s182 = smul.u32 2, %s21
        $region32: #{feature_extractor.1} parent=27 // pred_fallthru
          _
      $region28: #{feature_extractor.1} parent=5 // pred_fallthru
        _
      %p183 = scmp.le.s32.totalorder 1, %s13
      %p184 = scmp.lt.s32.totalorder %s13, 3
      %p185 = pnand %p183, %p184
      %p186 = pneg %p185
      // Predicated region
      $region33: #{feature_extractor.1} parent=5 // pred_check
        _
      $region34: #{feature_extractor.1} parent=5 // pred_check_branch
        %188 = sbr.rel (%p185) target = $region36
      $region35: #{feature_extractor.1} parent=5 // pred_region
        %s189 = ssub.s32 %s13, 1
        %s190 = smul.u32 2, %s23
        %p191 = scmp.lt.s32.totalorder %s22, 1
        %s192 = scalar_select %p191, %s22, 1
        %p193 = scmp.lt.s32.totalorder %s190, 1
        %s194 = scalar_select %p193, %s190, 1
        %s195 = smul.addr %s192, 2
        %s196 = sadd.s32 %s194, %s195
        %s197 = smul.addr %s196, 4
        %s198 = scalar_lea.vmem %s0, %s197
        %p199 = pneg %p53
        %p200 = pneg %p50
        %p201 = pneg %p74
        %p202 = pneg %p71
        %p203 = pneg %p95
        %p204 = pneg %p92
        %p205 = pneg %p116
        %p206 = pneg %p113
        %p207 = pneg %p142
        %p208 = pneg %p139
        %s209 = sand.u32 %s129, 1
        %s210 = scalar_lea.sflag [#allocation4], %s209
        %s211 = sand.u32 %s129, 1
        %s212 = scalar_lea.vmem [#allocation3], %s211
        %s213 = smul.u32 2, %s23
        %p214 = scmp.lt.s32.totalorder %s22, 1
        %s215 = scalar_select %p214, %s22, 1
        %p216 = scmp.lt.s32.totalorder %s213, 1
        %s217 = scalar_select %p216, %s213, 1
        %s218 = smul.addr %s215, 2
        %s219 = sadd.s32 %s217, %s218
        %s220 = smul.addr %s219, 4
        %s221 = scalar_lea.vmem %s0, %s220
        %s222 = smul.u32 2, %s23
        %p224 = scmp.eq.s32.totalorder %s23, 0
        // Predicated region
        $region37: #{feature_extractor.1} parent=35 // pred_check
          %p225 = pneg %p224
        $region38: #{feature_extractor.1} parent=35 // pred_check_branch
          %227 = sbr.rel (%p225) target = $region40
        $region39: #{feature_extractor.1} parent=35 // pred_region
          %228 = vst [vmem:[#allocation2] sm:$0xff] 0.0
          %229 = vst [vmem:[#allocation2 + $0x8] sm:$0xff] 0.0
          %230 = vst [vmem:[#allocation2 + $0x10] sm:$0xff] 0.0
          %231 = vst [vmem:[#allocation2 + $0x18] sm:$0xff] 0.0
          %232 = vst [vmem:[#allocation2 + $0x20] sm:$0xff] 0.0
          %233 = vst [vmem:[#allocation2 + $0x28] sm:$0xff] 0.0
          %234 = vst [vmem:[#allocation2 + $0x30] sm:$0xff] 0.0
          %235 = vst [vmem:[#allocation2 + $0x38] sm:$0xff] 0.0
          %236 = vst [vmem:[#allocation2 + $0x40] sm:$0xff] 0.0
          %237 = vst [vmem:[#allocation2 + $0x48] sm:$0xff] 0.0
          %238 = vst [vmem:[#allocation2 + $0x50] sm:$0xff] 0.0
          %239 = vst [vmem:[#allocation2 + $0x58] sm:$0xff] 0.0
          %240 = vst [vmem:[#allocation2 + $0x60] sm:$0xff] 0.0
          %241 = vst [vmem:[#allocation2 + $0x68] sm:$0xff] 0.0
          %242 = vst [vmem:[#allocation2 + $0x70] sm:$0xff] 0.0
          %243 = vst [vmem:[#allocation2 + $0x78] sm:$0xff] 0.0
          %244 = vst [vmem:[#allocation2 + $0x80] sm:$0xff] 0.0
          %245 = vst [vmem:[#allocation2 + $0x88] sm:$0xff] 0.0
          %246 = vst [vmem:[#allocation2 + $0x90] sm:$0xff] 0.0
          %247 = vst [vmem:[#allocation2 + $0x98] sm:$0xff] 0.0
          %248 = vst [vmem:[#allocation2 + $0xa0] sm:$0xff] 0.0
          %249 = vst [vmem:[#allocation2 + $0xa8] sm:$0xff] 0.0
          %250 = vst [vmem:[#allocation2 + $0xb0] sm:$0xff] 0.0
          %251 = vst [vmem:[#allocation2 + $0xb8] sm:$0xff] 0.0
          %252 = vst [vmem:[#allocation2 + $0xc0] sm:$0xff] 0.0
          %253 = vst [vmem:[#allocation2 + $0xc8] sm:$0xff] 0.0
          %254 = vst [vmem:[#allocation2 + $0xd0] sm:$0xff] 0.0
          %255 = vst [vmem:[#allocation2 + $0xd8] sm:$0xff] 0.0
          %256 = vst [vmem:[#allocation2 + $0xe0] sm:$0xff] 0.0
          %257 = vst [vmem:[#allocation2 + $0xe8] sm:$0xff] 0.0
          %258 = vst [vmem:[#allocation2 + $0xf0] sm:$0xff] 0.0
          %259 = vst [vmem:[#allocation2 + $0xf8] sm:$0xff] 0.0
        $region40: #{feature_extractor.1} parent=35 // pred_fallthru
          _
        %v260 = vld [vmem:[%s1] sm:$0xf]
        %v261 = vld [vmem:[%s1 + $0x4] sm:$0xf]
        %v262 = vld [vmem:[%s1 + $0x8] sm:$0xf]
        %v263 = vld [vmem:[%s1 + $0xc] sm:$0xf]
        %v264 = vld [vmem:[%s1 + $0x10] sm:$0xf]
        %v265 = vld [vmem:[%s1 + $0x14] sm:$0xf]
        %v266 = vld [vmem:[%s1 + $0x18] sm:$0xf]
        %v267 = vld [vmem:[%s1 + $0x1c] sm:$0xf]
        %v268 = vld [vmem:[%s1 + $0x20] sm:$0xf]
        %v269 = vld [vmem:[%s1 + $0x24] sm:$0xf]
        %v270 = vld [vmem:[%s1 + $0x28] sm:$0xf]
        %v271 = vld [vmem:[%s1 + $0x2c] sm:$0xf]
        %v272 = vld [vmem:[%s1 + $0x30] sm:$0xf]
        %v273 = vld [vmem:[%s1 + $0x34] sm:$0xf]
        %v274 = vld [vmem:[%s1 + $0x38] sm:$0xf]
        %v275 = vld [vmem:[%s1 + $0x3c] sm:$0xf]
        %v276 = vld [vmem:[%s221] sm:$0xff]
        %v293 = vunpack.c.l.b16 %v260
        %v294 = vunpack.c.l.b16 %v261
        %v295 = vunpack.c.l.b16 %v262
        %v296 = vunpack.c.l.b16 %v263
        %v297 = vunpack.c.l.b16 %v264
        %v298 = vunpack.c.l.b16 %v265
        %v299 = vunpack.c.l.b16 %v266
        %v300 = vunpack.c.l.b16 %v267
        %v301 = vunpack.c.l.b16 %v268
        %v302 = vunpack.c.l.b16 %v269
        %v303 = vunpack.c.l.b16 %v270
        %v304 = vunpack.c.l.b16 %v271
        %v305 = vunpack.c.l.b16 %v272
        %v306 = vunpack.c.l.b16 %v273
        %v307 = vunpack.c.l.b16 %v274
        %v308 = vunpack.c.l.b16 %v275
        %v309 = vpack.c.b16 %v294, %v293
        %v310 = vpack.c.b16 %v296, %v295
        %v311 = vpack.c.b16 %v298, %v297
        %v312 = vpack.c.b16 %v300, %v299
        %v313 = vpack.c.b16 %v302, %v301
        %v314 = vpack.c.b16 %v304, %v303
        %v315 = vpack.c.b16 %v306, %v305
        %v316 = vpack.c.b16 %v308, %v307
        %v318 = vunpack.c.l.b16 %v276
        %v319 = vunpack.c.h.b16 %v276
        %v320 = vpack.c.b16 %v318, %v318
        %v321 = vpack.c.b16 %v319, %v319
        %vm322 = vcmask 64512
        %v324 = vsel %vm322, %v309, 0
        %v327 = vsel %vm322, %v310, 0
        %v330 = vsel %vm322, %v311, 0
        %v333 = vsel %vm322, %v312, 0
        %v336 = vsel %vm322, %v313, 0
        %v339 = vsel %vm322, %v314, 0
        %v342 = vsel %vm322, %v315, 0
        %v345 = vsel %vm322, %v316, 0
        %vm347 = vcmask 1043456
        %v349 = vsel %vm347, %v320, 0
        %v352 = vsel %vm347, %v321, 0
        %354 = vmatpush.bf16.msra.mxu0 0
        %355 = vmatpush.bf16.msra.mxu0 0
        %356 = vmatpush.bf16.msra.mxu0 0
        %357 = vmatpush.bf16.msra.mxu0 0
        %358 = vmatpush.bf16.msra.mxu0 0
        %359 = vmatpush.bf16.msra.mxu0 0
        %360 = vmatpush.bf16.msra.mxu0 0
        %361 = vmatpush.bf16.msra.mxu0 %v349
        %362 = vmatmul.bf16.gmra.mxu0 %v324
        %v363 = vpop.f32.mrf.mxu0
        %v364 = vadd.f32 0.0, %v363
        %v365 = vpop.f32.mrf.mxu0
        %v366 = vadd.f32 0.0, %v365
        %367 = vmatmul.bf16.gmra.mxu0 %v327
        %v368 = vpop.f32.mrf.mxu0
        %v369 = vadd.f32 0.0, %v368
        %v370 = vpop.f32.mrf.mxu0
        %v371 = vadd.f32 0.0, %v370
        %372 = vmatmul.bf16.gmra.mxu0 %v330
        %v373 = vpop.f32.mrf.mxu0
        %v374 = vadd.f32 0.0, %v373
        %v375 = vpop.f32.mrf.mxu0
        %v376 = vadd.f32 0.0, %v375
        %377 = vmatmul.bf16.gmra.mxu0 %v333
        %v378 = vpop.f32.mrf.mxu0
        %v379 = vadd.f32 0.0, %v378
        %v380 = vpop.f32.mrf.mxu0
        %v381 = vadd.f32 0.0, %v380
        %382 = vmatmul.bf16.gmra.mxu0 %v336
        %v383 = vpop.f32.mrf.mxu0
        %v384 = vadd.f32 0.0, %v383
        %v385 = vpop.f32.mrf.mxu0
        %v386 = vadd.f32 0.0, %v385
        %387 = vmatmul.bf16.gmra.mxu0 %v339
        %v388 = vpop.f32.mrf.mxu0
        %v389 = vadd.f32 0.0, %v388
        %v390 = vpop.f32.mrf.mxu0
        %v391 = vadd.f32 0.0, %v390
        %392 = vmatmul.bf16.gmra.mxu0 %v342
        %v393 = vpop.f32.mrf.mxu0
        %v394 = vadd.f32 0.0, %v393
        %v395 = vpop.f32.mrf.mxu0
        %v396 = vadd.f32 0.0, %v395
        %397 = vmatmul.bf16.gmra.mxu0 %v345
        %v398 = vpop.f32.mrf.mxu0
        %v399 = vadd.f32 0.0, %v398
        %v400 = vpop.f32.mrf.mxu0
        %v401 = vadd.f32 0.0, %v400
        %402 = vdwg.mxu0
        %403 = vmatpush.bf16.msra.mxu0 0
        %404 = vmatpush.bf16.msra.mxu0 0
        %405 = vmatpush.bf16.msra.mxu0 0
        %406 = vmatpush.bf16.msra.mxu0 0
        %407 = vmatpush.bf16.msra.mxu0 0
        %408 = vmatpush.bf16.msra.mxu0 0
        %409 = vmatpush.bf16.msra.mxu0 0
        %410 = vmatpush.bf16.msra.mxu0 %v352
        %411 = vmatmul.bf16.gmra.mxu0 %v324
        %v412 = vpop.f32.mrf.mxu0
        %v413 = vadd.f32 0.0, %v412
        %v414 = vpop.f32.mrf.mxu0
        %v415 = vadd.f32 0.0, %v414
        %416 = vmatmul.bf16.gmra.mxu0 %v327
        %v417 = vpop.f32.mrf.mxu0
        %v418 = vadd.f32 0.0, %v417
        %v419 = vpop.f32.mrf.mxu0
        %v420 = vadd.f32 0.0, %v419
        %421 = vmatmul.bf16.gmra.mxu0 %v330
        %v422 = vpop.f32.mrf.mxu0
        %v423 = vadd.f32 0.0, %v422
        %v424 = vpop.f32.mrf.mxu0
        %v425 = vadd.f32 0.0, %v424
        %426 = vmatmul.bf16.gmra.mxu0 %v333
        %v427 = vpop.f32.mrf.mxu0
        %v428 = vadd.f32 0.0, %v427
        %v429 = vpop.f32.mrf.mxu0
        %v430 = vadd.f32 0.0, %v429
        %431 = vmatmul.bf16.gmra.mxu0 %v336
        %v432 = vpop.f32.mrf.mxu0
        %v433 = vadd.f32 0.0, %v432
        %v434 = vpop.f32.mrf.mxu0
        %v435 = vadd.f32 0.0, %v434
        %436 = vmatmul.bf16.gmra.mxu0 %v339
        %v437 = vpop.f32.mrf.mxu0
        %v438 = vadd.f32 0.0, %v437
        %v439 = vpop.f32.mrf.mxu0
        %v440 = vadd.f32 0.0, %v439
        %441 = vmatmul.bf16.gmra.mxu0 %v342
        %v442 = vpop.f32.mrf.mxu0
        %v443 = vadd.f32 0.0, %v442
        %v444 = vpop.f32.mrf.mxu0
        %v445 = vadd.f32 0.0, %v444
        %446 = vmatmul.bf16.gmra.mxu0 %v345
        %v447 = vpop.f32.mrf.mxu0
        %v448 = vadd.f32 0.0, %v447
        %v449 = vpop.f32.mrf.mxu0
        %v450 = vadd.f32 0.0, %v449
        %451 = vdwg.mxu0
        %v452 = vld [vmem:[#allocation2] sm:$0xff]
        %v453 = vld [vmem:[#allocation2 + $0x8] sm:$0xff]
        %v454 = vld [vmem:[#allocation2 + $0x10] sm:$0xff]
        %v455 = vld [vmem:[#allocation2 + $0x18] sm:$0xff]
        %v456 = vld [vmem:[#allocation2 + $0x20] sm:$0xff]
        %v457 = vld [vmem:[#allocation2 + $0x28] sm:$0xff]
        %v458 = vld [vmem:[#allocation2 + $0x30] sm:$0xff]
        %v459 = vld [vmem:[#allocation2 + $0x38] sm:$0xff]
        %v460 = vld [vmem:[#allocation2 + $0x40] sm:$0xff]
        %v461 = vld [vmem:[#allocation2 + $0x48] sm:$0xff]
        %v462 = vld [vmem:[#allocation2 + $0x50] sm:$0xff]
        %v463 = vld [vmem:[#allocation2 + $0x58] sm:$0xff]
        %v464 = vld [vmem:[#allocation2 + $0x60] sm:$0xff]
        %v465 = vld [vmem:[#allocation2 + $0x68] sm:$0xff]
        %v466 = vld [vmem:[#allocation2 + $0x70] sm:$0xff]
        %v467 = vld [vmem:[#allocation2 + $0x78] sm:$0xff]
        %v468 = vld [vmem:[#allocation2 + $0x80] sm:$0xff]
        %v469 = vld [vmem:[#allocation2 + $0x88] sm:$0xff]
        %v470 = vld [vmem:[#allocation2 + $0x90] sm:$0xff]
        %v471 = vld [vmem:[#allocation2 + $0x98] sm:$0xff]
        %v472 = vld [vmem:[#allocation2 + $0xa0] sm:$0xff]
        %v473 = vld [vmem:[#allocation2 + $0xa8] sm:$0xff]
        %v474 = vld [vmem:[#allocation2 + $0xb0] sm:$0xff]
        %v475 = vld [vmem:[#allocation2 + $0xb8] sm:$0xff]
        %v476 = vld [vmem:[#allocation2 + $0xc0] sm:$0xff]
        %v477 = vld [vmem:[#allocation2 + $0xc8] sm:$0xff]
        %v478 = vld [vmem:[#allocation2 + $0xd0] sm:$0xff]
        %v479 = vld [vmem:[#allocation2 + $0xd8] sm:$0xff]
        %v480 = vld [vmem:[#allocation2 + $0xe0] sm:$0xff]
        %v481 = vld [vmem:[#allocation2 + $0xe8] sm:$0xff]
        %v482 = vld [vmem:[#allocation2 + $0xf0] sm:$0xff]
        %v483 = vld [vmem:[#allocation2 + $0xf8] sm:$0xff]
        %v484 = vmax.f32 %v364, 0.0
        %v485 = vmax.f32 %v413, 0.0
        %v486 = vmax.f32 %v366, 0.0
        %v487 = vmax.f32 %v415, 0.0
        %v488 = vmax.f32 %v369, 0.0
        %v489 = vmax.f32 %v418, 0.0
        %v490 = vmax.f32 %v371, 0.0
        %v491 = vmax.f32 %v420, 0.0
        %v492 = vmax.f32 %v374, 0.0
        %v493 = vmax.f32 %v423, 0.0
        %v494 = vmax.f32 %v376, 0.0
        %v495 = vmax.f32 %v425, 0.0
        %v496 = vmax.f32 %v379, 0.0
        %v497 = vmax.f32 %v428, 0.0
        %v498 = vmax.f32 %v381, 0.0
        %v499 = vmax.f32 %v430, 0.0
        %v500 = vmax.f32 %v384, 0.0
        %v501 = vmax.f32 %v433, 0.0
        %v502 = vmax.f32 %v386, 0.0
        %v503 = vmax.f32 %v435, 0.0
        %v504 = vmax.f32 %v389, 0.0
        %v505 = vmax.f32 %v438, 0.0
        %v506 = vmax.f32 %v391, 0.0
        %v507 = vmax.f32 %v440, 0.0
        %v508 = vmax.f32 %v394, 0.0
        %v509 = vmax.f32 %v443, 0.0
        %v510 = vmax.f32 %v396, 0.0
        %v511 = vmax.f32 %v445, 0.0
        %v512 = vmax.f32 %v399, 0.0
        %v513 = vmax.f32 %v448, 0.0
        %v514 = vmax.f32 %v401, 0.0
        %v515 = vmax.f32 %v450, 0.0
        %v516 = vadd.f32 %v452, %v484
        %v517 = vadd.f32 %v453, %v485
        %v518 = vadd.f32 %v454, %v486
        %v519 = vadd.f32 %v455, %v487
        %v520 = vadd.f32 %v456, %v488
        %v521 = vadd.f32 %v457, %v489
        %v522 = vadd.f32 %v458, %v490
        %v523 = vadd.f32 %v459, %v491
        %v524 = vadd.f32 %v460, %v492
        %v525 = vadd.f32 %v461, %v493
        %v526 = vadd.f32 %v462, %v494
        %v527 = vadd.f32 %v463, %v495
        %v528 = vadd.f32 %v464, %v496
        %v529 = vadd.f32 %v465, %v497
        %v530 = vadd.f32 %v466, %v498
        %v531 = vadd.f32 %v467, %v499
        %v532 = vadd.f32 %v468, %v500
        %v533 = vadd.f32 %v469, %v501
        %v534 = vadd.f32 %v470, %v502
        %v535 = vadd.f32 %v471, %v503
        %v536 = vadd.f32 %v472, %v504
        %v537 = vadd.f32 %v473, %v505
        %v538 = vadd.f32 %v474, %v506
        %v539 = vadd.f32 %v475, %v507
        %v540 = vadd.f32 %v476, %v508
        %v541 = vadd.f32 %v477, %v509
        %v542 = vadd.f32 %v478, %v510
        %v543 = vadd.f32 %v479, %v511
        %v544 = vadd.f32 %v480, %v512
        %v545 = vadd.f32 %v481, %v513
        %v546 = vadd.f32 %v482, %v514
        %v547 = vadd.f32 %v483, %v515
        %548 = vst [vmem:[#allocation2] sm:$0xff] %v516
        %549 = vst [vmem:[#allocation2 + $0x8] sm:$0xff] %v517
        %550 = vst [vmem:[#allocation2 + $0x10] sm:$0xff] %v518
        %551 = vst [vmem:[#allocation2 + $0x18] sm:$0xff] %v519
        %552 = vst [vmem:[#allocation2 + $0x20] sm:$0xff] %v520
        %553 = vst [vmem:[#allocation2 + $0x28] sm:$0xff] %v521
        %554 = vst [vmem:[#allocation2 + $0x30] sm:$0xff] %v522
        %555 = vst [vmem:[#allocation2 + $0x38] sm:$0xff] %v523
        %556 = vst [vmem:[#allocation2 + $0x40] sm:$0xff] %v524
        %557 = vst [vmem:[#allocation2 + $0x48] sm:$0xff] %v525
        %558 = vst [vmem:[#allocation2 + $0x50] sm:$0xff] %v526
        %559 = vst [vmem:[#allocation2 + $0x58] sm:$0xff] %v527
        %560 = vst [vmem:[#allocation2 + $0x60] sm:$0xff] %v528
        %561 = vst [vmem:[#allocation2 + $0x68] sm:$0xff] %v529
        %562 = vst [vmem:[#allocation2 + $0x70] sm:$0xff] %v530
        %563 = vst [vmem:[#allocation2 + $0x78] sm:$0xff] %v531
        %564 = vst [vmem:[#allocation2 + $0x80] sm:$0xff] %v532
        %565 = vst [vmem:[#allocation2 + $0x88] sm:$0xff] %v533
        %566 = vst [vmem:[#allocation2 + $0x90] sm:$0xff] %v534
        %567 = vst [vmem:[#allocation2 + $0x98] sm:$0xff] %v535
        %568 = vst [vmem:[#allocation2 + $0xa0] sm:$0xff] %v536
        %569 = vst [vmem:[#allocation2 + $0xa8] sm:$0xff] %v537
        %570 = vst [vmem:[#allocation2 + $0xb0] sm:$0xff] %v538
        %571 = vst [vmem:[#allocation2 + $0xb8] sm:$0xff] %v539
        %572 = vst [vmem:[#allocation2 + $0xc0] sm:$0xff] %v540
        %573 = vst [vmem:[#allocation2 + $0xc8] sm:$0xff] %v541
        %574 = vst [vmem:[#allocation2 + $0xd0] sm:$0xff] %v542
        %575 = vst [vmem:[#allocation2 + $0xd8] sm:$0xff] %v543
        %576 = vst [vmem:[#allocation2 + $0xe0] sm:$0xff] %v544
        %577 = vst [vmem:[#allocation2 + $0xe8] sm:$0xff] %v545
        %578 = vst [vmem:[#allocation2 + $0xf0] sm:$0xff] %v546
        %579 = vst [vmem:[#allocation2 + $0xf8] sm:$0xff] %v547
        // Predicated region
        $region41: #{feature_extractor.1} parent=35 // pred_check
          %p580 = pneg %p224
        $region42: #{feature_extractor.1} parent=35 // pred_check_branch
          %582 = sbr.rel (%p580) target = $region44
        $region43: #{feature_extractor.1} parent=35 // pred_region
          %v583 = vld [vmem:[#allocation2] sm:$0xff]
          %v584 = vld [vmem:[#allocation2 + $0x8] sm:$0xff]
          %v585 = vld [vmem:[#allocation2 + $0x10] sm:$0xff]
          %v586 = vld [vmem:[#allocation2 + $0x18] sm:$0xff]
          %v587 = vld [vmem:[#allocation2 + $0x20] sm:$0xff]
          %v588 = vld [vmem:[#allocation2 + $0x28] sm:$0xff]
          %v589 = vld [vmem:[#allocation2 + $0x30] sm:$0xff]
          %v590 = vld [vmem:[#allocation2 + $0x38] sm:$0xff]
          %v591 = vld [vmem:[#allocation2 + $0x40] sm:$0xff]
          %v592 = vld [vmem:[#allocation2 + $0x48] sm:$0xff]
          %v593 = vld [vmem:[#allocation2 + $0x50] sm:$0xff]
          %v594 = vld [vmem:[#allocation2 + $0x58] sm:$0xff]
          %v595 = vld [vmem:[#allocation2 + $0x60] sm:$0xff]
          %v596 = vld [vmem:[#allocation2 + $0x68] sm:$0xff]
          %v597 = vld [vmem:[#allocation2 + $0x70] sm:$0xff]
          %v598 = vld [vmem:[#allocation2 + $0x78] sm:$0xff]
          %v599 = vld [vmem:[#allocation2 + $0x80] sm:$0xff]
          %v600 = vld [vmem:[#allocation2 + $0x88] sm:$0xff]
          %v601 = vld [vmem:[#allocation2 + $0x90] sm:$0xff]
          %v602 = vld [vmem:[#allocation2 + $0x98] sm:$0xff]
          %v603 = vld [vmem:[#allocation2 + $0xa0] sm:$0xff]
          %v604 = vld [vmem:[#allocation2 + $0xa8] sm:$0xff]
          %v605 = vld [vmem:[#allocation2 + $0xb0] sm:$0xff]
          %v606 = vld [vmem:[#allocation2 + $0xb8] sm:$0xff]
          %v607 = vld [vmem:[#allocation2 + $0xc0] sm:$0xff]
          %v608 = vld [vmem:[#allocation2 + $0xc8] sm:$0xff]
          %v609 = vld [vmem:[#allocation2 + $0xd0] sm:$0xff]
          %v610 = vld [vmem:[#allocation2 + $0xd8] sm:$0xff]
          %v611 = vld [vmem:[#allocation2 + $0xe0] sm:$0xff]
          %v612 = vld [vmem:[#allocation2 + $0xe8] sm:$0xff]
          %v613 = vld [vmem:[#allocation2 + $0xf0] sm:$0xff]
          %v614 = vld [vmem:[#allocation2 + $0xf8] sm:$0xff]
          %615 = vmatpush.xpose.msra.mxu0 %v613
          %616 = vmatpush.xpose.msra.mxu0 %v611
          %617 = vmatpush.xpose.msra.mxu0 %v609
          %618 = vmatpush.xpose.msra.mxu0 %v607
          %619 = vmatpush.xpose.msra.mxu0 %v605
          %620 = vmatpush.xpose.msra.mxu0 %v603
          %621 = vmatpush.xpose.msra.mxu0 %v601
          %622 = vmatpush.xpose.msra.mxu0 %v599
          %623 = vmatpush.xpose.msra.mxu0 %v597
          %624 = vmatpush.xpose.msra.mxu0 %v595
          %625 = vmatpush.xpose.msra.mxu0 %v593
          %626 = vmatpush.xpose.msra.mxu0 %v591
          %627 = vmatpush.xpose.msra.mxu0 %v589
          %628 = vmatpush.xpose.msra.mxu0 %v587
          %629 = vmatpush.xpose.msra.mxu0 %v585
          %630 = vmatpush.xpose.msra.mxu0 %v583
          %631 = vmatmul.f32.gmra.mxu0 1.0
          %v632 = vpop.f32.mrf.mxu0
          %v633 = vadd.f32 0.0, %v632
          %634 = vdwg.mxu0
          %635 = vmatpush.xpose.msra.mxu0 %v614
          %636 = vmatpush.xpose.msra.mxu0 %v612
          %637 = vmatpush.xpose.msra.mxu0 %v610
          %638 = vmatpush.xpose.msra.mxu0 %v608
          %639 = vmatpush.xpose.msra.mxu0 %v606
          %640 = vmatpush.xpose.msra.mxu0 %v604
          %641 = vmatpush.xpose.msra.mxu0 %v602
          %642 = vmatpush.xpose.msra.mxu0 %v600
          %643 = vmatpush.xpose.msra.mxu0 %v598
          %644 = vmatpush.xpose.msra.mxu0 %v596
          %645 = vmatpush.xpose.msra.mxu0 %v594
          %646 = vmatpush.xpose.msra.mxu0 %v592
          %647 = vmatpush.xpose.msra.mxu0 %v590
          %648 = vmatpush.xpose.msra.mxu0 %v588
          %649 = vmatpush.xpose.msra.mxu0 %v586
          %650 = vmatpush.xpose.msra.mxu0 %v584
          %651 = vmatmul.f32.gmra.mxu0 1.0
          %v652 = vpop.f32.mrf.mxu0
          %v653 = vadd.f32 %v633, %v652
          %654 = vdwg.mxu0
          %v655 = vpack.c.bf16 %v653, %v653
          %v656 = vld [vmem:[%s2] sm:$0xf]
          %v657 = vld [vmem:[%s2 + $0x4] sm:$0xf]
          %v658 = vld [vmem:[%s2 + $0x8] sm:$0xf]
          %v659 = vld [vmem:[%s2 + $0xc] sm:$0xf]
          %v660 = vld [vmem:[%s2 + $0x10] sm:$0xf]
          %v661 = vld [vmem:[%s2 + $0x14] sm:$0xf]
          %v662 = vld [vmem:[%s2 + $0x18] sm:$0xf]
          %v663 = vld [vmem:[%s2 + $0x1c] sm:$0xf]
          %v664 = vld [vmem:[%s2 + $0x20] sm:$0xf]
          %v665 = vld [vmem:[%s2 + $0x24] sm:$0xf]
          %v666 = vld [vmem:[%s2 + $0x28] sm:$0xf]
          %v667 = vld [vmem:[%s2 + $0x2c] sm:$0xf]
          %v668 = vld [vmem:[%s2 + $0x30] sm:$0xf]
          %v669 = vld [vmem:[%s2 + $0x34] sm:$0xf]
          %v670 = vld [vmem:[%s2 + $0x38] sm:$0xf]
          %v671 = vld [vmem:[%s2 + $0x3c] sm:$0xf]
          %v672 = vld [vmem:[%s3] sm:$0x1]
          %v689 = vunpack.c.l.b16 %v656
          %v690 = vunpack.c.l.b16 %v657
          %v691 = vunpack.c.l.b16 %v658
          %v692 = vunpack.c.l.b16 %v659
          %v693 = vunpack.c.l.b16 %v660
          %v694 = vunpack.c.l.b16 %v661
          %v695 = vunpack.c.l.b16 %v662
          %v696 = vunpack.c.l.b16 %v663
          %v697 = vunpack.c.l.b16 %v664
          %v698 = vunpack.c.l.b16 %v665
          %v699 = vunpack.c.l.b16 %v666
          %v700 = vunpack.c.l.b16 %v667
          %v701 = vunpack.c.l.b16 %v668
          %v702 = vunpack.c.l.b16 %v669
          %v703 = vunpack.c.l.b16 %v670
          %v704 = vunpack.c.l.b16 %v671
          %v705 = vpack.c.b16 %v690, %v689
          %v706 = vpack.c.b16 %v692, %v691
          %v707 = vpack.c.b16 %v694, %v693
          %v708 = vpack.c.b16 %v696, %v695
          %v709 = vpack.c.b16 %v698, %v697
          %v710 = vpack.c.b16 %v700, %v699
          %v711 = vpack.c.b16 %v702, %v701
          %v712 = vpack.c.b16 %v704, %v703
          %721 = vmatpush.bf16.msra.mxu0 %v712
          %722 = vmatpush.bf16.msra.mxu0 %v711
          %723 = vmatpush.bf16.msra.mxu0 %v710
          %724 = vmatpush.bf16.msra.mxu0 %v709
          %725 = vmatpush.bf16.msra.mxu0 %v708
          %726 = vmatpush.bf16.msra.mxu0 %v707
          %727 = vmatpush.bf16.msra.mxu0 %v706
          %728 = vmatpush.bf16.msra.mxu0 %v705
          %729 = vmatmul.bf16.gmra.mxu0 %v655
          %v730 = vpop.f32.mrf.mxu0
          %v731 = vadd.f32 %v672, %v730
          %v732 = vpop.f32.mrf.mxu0
          %733 = vdwg.mxu0
          %734 = vst [vmem:[%s212] sm:$0x1] %v731
        $region44: #{feature_extractor.1} parent=35 // pred_fallthru
          _
        %s735 = sand.u32 %s129, 1
        %s736 = scalar_lea.sflag [#allocation4], %s735
        %s737 = sand.u32 %s129, 1
        %s738 = scalar_lea.vmem [#allocation3], %s737
        // Predicated region
        $region45: #{feature_extractor.1} parent=35 // pred_check
          %p739 = pneg %p139
        $region46: #{feature_extractor.1} parent=35 // pred_check_branch
          %741 = sbr.rel (%p739) target = $region48
        $region47: #{feature_extractor.1} parent=35 // pred_region
          %743 = vsyncadd %s736, 0
          %s744 = scalar_lea.hbm %s4, %s22
          %s746 = sshll.u32 %s738, 4
          %s747 = int_to_ptr.vmem [resolvable:$true] %s746
          %s748 = sshll.u32 %s744, 4
          %s749 = int_to_ptr.hbm [resolvable:$true] %s748
          %751 = dma.vmem_to_hbm [thread:$0]  %s747, 16, %s749, %s736
        $region48: #{feature_extractor.1} parent=35 // pred_fallthru
          _
      $region36: #{feature_extractor.1} parent=5 // pred_fallthru
        _
      %p752 = scmp.le.s32.totalorder 2, %s13
      // Predicated region
      $region49: #{feature_extractor.1} parent=5 // pred_check
        %p753 = pneg %p752
      $region50: #{feature_extractor.1} parent=5 // pred_check_branch
        %755 = sbr.rel (%p753) target = $region52
      $region51: #{feature_extractor.1} parent=5 // pred_region
        %s756 = ssub.s32 %s13, 2
        // Predicated region
        $region53: #{feature_extractor.1} parent=51 // pred_check
          %p757 = pneg %p145
        $region54: #{feature_extractor.1} parent=51 // pred_check_branch
          %759 = sbr.rel (%p757) target = $region56
        $region55: #{feature_extractor.1} parent=51 // pred_region
          %s760 = sand.u32 %s130, 1
          %s761 = scalar_lea.sflag [#allocation4], %s760
          %s762 = sand.u32 %s130, 1
          %s763 = scalar_lea.vmem [#allocation3], %s762
          %765 = dma.done %s761, 16
        $region56: #{feature_extractor.1} parent=51 // pred_fallthru
          _
      $region52: #{feature_extractor.1} parent=5 // pred_fallthru
        _
    $region6: #{feature_extractor.1} parent=1 // loop_footer
      %s17 = sadd.s32 1, %s13
    $region7: #{feature_extractor.1} parent=1 // loop_footer_branch
      %12 = sbr.rel target = $region3
    $region8: #{feature_extractor.1} parent=1 // loop_exit
      _
    %766 = vsyncpa [#allocation4], 1
    %s767 = scalar_lea.sflag [#allocation4], 1
    %768 = vsyncpa %s767, 1

</llo_original>
